<compile_context>
chip_gen: v6e
topology: v6e:2x2x1
jax: 0.10.0
libtpu: 0.0.40
codegen_flags: <defaults>
</compile_context>

<pallas_src>
import functools

import jax
import jax.numpy as jnp
import numpy as np
from jax.experimental import pallas as pl
from jax.experimental.pallas import tpu as pltpu


# --------------------------------------------------------------------------- #
# Kernel
# --------------------------------------------------------------------------- #
def intent_head_kernel(hidden_ref, w1_ref, b1_ref, w2_ref, b2_ref, *rest,
                       apply_log_softmax: bool,
                       apply_temperature: bool,
                       inv_temperature: float,
                       compute_loss: bool):
    """Fused CLS head: Linear -> ReLU -> Linear (+ cross-entropy / log-softmax).

    hidden_ref : [TB, H]   bf16  CLS hidden states
    w1_ref     : [H, D]    bf16  classify.top weight (pre-transposed)
    b1_ref     : [1, D]    f32
    w2_ref     : [D, Cp]   f32   classify.bottom weight (pre-transposed, class-padded)
    b2_ref     : [1, Cp]   f32   (padded classes hold -1e30)
    tgt_ref    : [TB, 1]   int32 (only when compute_loss)
    out_ref    : [TB, Cp]  f32   logits or log-softmax (compile-time gated)
    loss_ref   : [TB, 1]   f32   per-example CE loss (only when compute_loss)
    """
    if compute_loss:
        tgt_ref, out_ref, loss_ref = rest
    else:
        (out_ref,) = rest

    # bf16 x bf16 -> f32 on the MXU (native rate); no f32 upcast copy of the
    # hidden tile.  Dropout is identity at inference.
    middle = jnp.dot(hidden_ref[...], w1_ref[...],
                     preferred_element_type=jnp.float32) + b1_ref[...]     # [TB, D]
    middle = jnp.maximum(middle, 0.0)
    logits = jnp.dot(middle, w2_ref[...],
                     preferred_element_type=jnp.float32) + b2_ref[...]     # [TB, Cp]

    if apply_log_softmax:          # 'maxprob'/'dropout'/'odin'/'entropy' outcomes
        s = logits * inv_temperature if apply_temperature else logits
        m = jnp.max(s, axis=-1, keepdims=True)
        sh = s - m
        out_ref[...] = (sh - jnp.log(jnp.sum(jnp.exp(sh), axis=-1, keepdims=True))
                        ).astype(out_ref.dtype)
    else:                          # outcome == 'loss': output is the raw logit
        out_ref[...] = logits.astype(out_ref.dtype)

    if compute_loss:
        # CrossEntropyLoss(reduction='none'): logsumexp(logits) - logits[target].
        # Padded classes carry logit = -1e30 -> exp underflows to 0 exactly.
        m = jnp.max(logits, axis=-1, keepdims=True)
        lse = m + jnp.log(jnp.sum(jnp.exp(logits - m), axis=-1, keepdims=True))   # [TB, 1]
        onehot = jax.lax.broadcasted_iota(jnp.int32, logits.shape, 1) == tgt_ref[...]
        picked = jnp.sum(jnp.where(onehot, logits, 0.0), axis=-1, keepdims=True)  # [TB, 1]
        loss_ref[...] = (lse - picked).astype(loss_ref.dtype)


# --------------------------------------------------------------------------- #
# One-time parameter preparation (hoisted out of the forward path)
# --------------------------------------------------------------------------- #
def prepare_intent_head_params(w_top, b_top, w_bot, b_bot,
                               *, compute_dtype=jnp.bfloat16, lane_pad=128):
    """Transpose / cast / pad the classifier weights ONCE at model init."""
    D, H = w_top.shape
    C = w_bot.shape[0]
    c_pad = max(lane_pad, ((C + lane_pad - 1) // lane_pad) * lane_pad)

    w1_t = jnp.asarray(w_top).astype(compute_dtype).T              # [H, D]  bf16
    b1 = jnp.asarray(b_top, jnp.float32).reshape(1, D)              # [1, D]
    w2_t = jnp.asarray(w_bot, jnp.float32).T                        # [D, C]
    b2 = jnp.asarray(b_bot, jnp.float32).reshape(1, C)              # [1, C]
    if c_pad > C:
        w2_t = jnp.pad(w2_t, ((0, 0), (0, c_pad - C)))
        b2 = jnp.pad(b2, ((0, 0), (0, c_pad - C)), constant_values=-1e30)
    return dict(w1_t=w1_t, b1=b1, w2_t=w2_t, b2=b2, num_classes=C)


# --------------------------------------------------------------------------- #
# Forward wrapper
# --------------------------------------------------------------------------- #
def intent_model_forward(last_hidden_state, targets, params,
                         *, outcome='loss', temperature=1.0, block_b=None):
    """IntentModel.forward head: encoder output -> (output, loss).

    last_hidden_state : [B, S, H] encoder output.
        TODO(synk): the pretrained BERT/RoBERTa encoder itself is an external
        module and is not re-implemented as a Pallas kernel here.
    targets : [B] int class indices (only used for outcome='loss').
    params  : dict from prepare_intent_head_params (pre-transposed/cast/padded).
    """
    B, S, H = last_hidden_state.shape
    w1_t, b1, w2_t, b2 = params['w1_t'], params['b1'], params['w2_t'], params['b2']
    C = params['num_classes']
    D = w1_t.shape[1]
    Cp = w2_t.shape[1]
    assert w1_t.shape[0] == H

    # CLS slice + compute-dtype cast as ONE fused XLA op (B*H bytes).  The
    # in-kernel (block_b, Squeezed, H) strided CLS DMA was flagged as a
    # lowering / sublane-padding risk, so the slab is made contiguous upstream.
    cls = last_hidden_state[:, 0, :].astype(w1_t.dtype)              # [B, H] bf16

    if block_b is None:
        block_b = min(B, 512)
        # Keep >= 2 batch tiles when B allows so the "parallel" axis can split
        # across both v7x TensorCores.
        if B > 16 and pl.cdiv(B, block_b) < 2:
            half = (B + 1) // 2
            block_b = min(((half + 7) // 8) * 8, B)
    grid_b = pl.cdiv(B, block_b)

    apply_log_softmax = outcome in ('dropout', 'maxprob', 'odin', 'entropy')
    apply_temperature = outcome in ('odin', 'entropy') and float(temperature) != 1.0
    inv_temperature = 1.0 / float(temperature)
    compute_loss = (outcome == 'loss')
    # TODO(synk): mixup, training-mode dropout, odin input noise and the
    # 'gradient'/'nml'/'mahalanobis*' outcome branches are not implemented.

    const_mode = pl.Buffered(1)   # constant index map -> single-buffer the weights
    in_specs = [
        pl.BlockSpec((block_b, H), lambda i: (i, 0)),                       # CLS tile
        pl.BlockSpec((H, D), lambda i: (0, 0), pipeline_mode=const_mode),   # W1 (bf16)
        pl.BlockSpec((1, D), lambda i: (0, 0), pipeline_mode=const_mode),   # b1
        pl.BlockSpec((D, Cp), lambda i: (0, 0), pipeline_mode=const_mode),  # W2 (f32)
        pl.BlockSpec((1, Cp), lambda i: (0, 0), pipeline_mode=const_mode),  # b2
    ]
    args = [cls, w1_t, b1, w2_t, b2]

    out_specs = [pl.BlockSpec((block_b, Cp), lambda i: (i, 0))]             # lane-dense logits
    out_shape = [jax.ShapeDtypeStruct((B, Cp), jnp.float32)]

    if compute_loss:
        tgt = jnp.asarray(targets, jnp.int32).reshape(B, 1)
        in_specs.append(pl.BlockSpec((block_b, 1), lambda i: (i, 0)))
        args.append(tgt)
        out_specs.append(pl.BlockSpec((block_b, 1), lambda i: (i, 0)))      # per-example CE
        out_shape.append(jax.ShapeDtypeStruct((B, 1), jnp.float32))

    kernel = functools.partial(
        intent_head_kernel,
        apply_log_softmax=apply_log_softmax,
        apply_temperature=apply_temperature,
        inv_temperature=inv_temperature,
        compute_loss=compute_loss,
    )

    results = pl.pallas_call(
        kernel,
        grid_spec=pltpu.PrefetchScalarGridSpec(
            num_scalar_prefetch=0,
            grid=(grid_b,),
            in_specs=in_specs,
            out_specs=out_specs,
        ),
        out_shape=out_shape,
        compiler_params=pltpu.CompilerParams(
            dimension_semantics=("parallel",),   # independent batch tiles
            vmem_limit_bytes=32 * 1024 * 1024,   # explicit; fits v5e/v6e/v7x budgets
        ),
    )(*args)

    if compute_loss:
        out_padded, per_ex = results
        loss = jnp.mean(per_ex)                 # torch: mean of reduction='none' CE
    else:
        (out_padded,) = results
        loss = jnp.float32(0.0)                 # torch.mean(zeros(B)) == 0

    output = out_padded[:, :C]                  # slice the 128-lane class pad away
    return output, loss


# --------------------------------------------------------------------------- #
# Self-test
# --------------------------------------------------------------------------- #
if __name__ == "__main__":
    # Small shapes implied by the module: batch=2, seq=8, embed_dim=32,
    # hidden_dim=16, target_size=8.
    B, S, H, D, C = 2, 8, 32, 16, 8
    key = jax.random.PRNGKey(0)
    k_h, k_w1, k_b1, k_w2, k_b2, k_t = jax.random.split(key, 6)

    last_hidden_state = jax.random.normal(k_h, (B, S, H), jnp.float32)   # encoder output
    targets = jax.random.randint(k_t, (B,), 0, C, dtype=jnp.int32)

    w_top = jax.random.normal(k_w1, (D, H), jnp.float32) * 0.05   # classify.top
    b_top = jax.random.normal(k_b1, (D,), jnp.float32) * 0.05
    w_bot = jax.random.normal(k_w2, (C, D), jnp.float32) * 0.05   # classify.bottom
    b_bot = jax.random.normal(k_b2, (C,), jnp.float32) * 0.05

    params = prepare_intent_head_params(w_top, b_top, w_bot, b_bot)   # once, at init
    output, loss = intent_model_forward(last_hidden_state, targets, params,
                                        outcome='loss')
    jax.block_until_ready((output, loss))

    # Reference on the same bf16-rounded hidden/W1 values (second matmul f32).
    h_bf = last_hidden_state[:, 0, :].astype(jnp.bfloat16).astype(jnp.float32)
    w1_bf = w_top.astype(jnp.bfloat16).astype(jnp.float32)
    mid_ref = jnp.maximum(h_bf @ w1_bf.T + b_top, 0.0)
    logit_ref = mid_ref @ w_bot.T + b_bot
    m = jnp.max(logit_ref, axis=-1, keepdims=True)
    lse = (m + jnp.log(jnp.sum(jnp.exp(logit_ref - m), axis=-1, keepdims=True)))[:, 0]
    picked = jnp.take_along_axis(logit_ref, targets[:, None], axis=-1)[:, 0]
    loss_ref = jnp.mean(lse - picked)

    np.testing.assert_allclose(np.asarray(output), np.asarray(logit_ref),
                               rtol=1e-3, atol=1e-3)
    np.testing.assert_allclose(float(loss), float(loss_ref), rtol=1e-3, atol=1e-3)
    print("KERNEL_OK")
</pallas_src>

<mosaic_0001>
module attributes {stable_mosaic.version = 11 : i64} {
  func.func @intent_head_kernel(%arg0: i32, %arg1: memref<2x32xbf16, #tpu.memory_space<vmem>>, %arg2: memref<32x16xbf16, #tpu.memory_space<vmem>>, %arg3: memref<1x16xf32, #tpu.memory_space<vmem>>, %arg4: memref<16x128xf32, #tpu.memory_space<vmem>>, %arg5: memref<1x128xf32, #tpu.memory_space<vmem>>, %arg6: memref<2x1xi32, #tpu.memory_space<vmem>>, %arg7: memref<2x128xf32, #tpu.memory_space<vmem>>, %arg8: memref<2x1xf32, #tpu.memory_space<vmem>>) attributes {dimension_semantics = [#tpu.dimension_semantics<parallel>], iteration_bounds = array<i64: 1>, scalar_prefetch = 0 : i64, scratch_operands = 0 : i64, tpu.core_type = #tpu.core_type<tc>, window_params = [{transform_indices = @transform_0, window_bounds = array<i64: 2, 32>}, {pipeline_mode = #tpu.pipeline_mode<synchronous>, transform_indices = @transform_1, window_bounds = array<i64: 32, 16>}, {pipeline_mode = #tpu.pipeline_mode<synchronous>, transform_indices = @transform_2, window_bounds = array<i64: 1, 16>}, {pipeline_mode = #tpu.pipeline_mode<synchronous>, transform_indices = @transform_3, window_bounds = array<i64: 16, 128>}, {pipeline_mode = #tpu.pipeline_mode<synchronous>, transform_indices = @transform_4, window_bounds = array<i64: 1, 128>}, {transform_indices = @transform_5, window_bounds = array<i64: 2, 1>}, {transform_indices = @transform_6, window_bounds = array<i64: 2, 128>}, {transform_indices = @transform_7, window_bounds = array<i64: 2, 1>}]} {
    %c0 = arith.constant 0 : index
    %c0_0 = arith.constant 0 : index
    %0 = vector.load %arg1[%c0, %c0_0] : memref<2x32xbf16, #tpu.memory_space<vmem>>, vector<2x32xbf16>
    %c0_1 = arith.constant 0 : index
    %c0_2 = arith.constant 0 : index
    %1 = vector.load %arg2[%c0_1, %c0_2] : memref<32x16xbf16, #tpu.memory_space<vmem>>, vector<32x16xbf16>
    %cst = arith.constant dense<0.000000e+00> : vector<2x16xf32>
    %2 = tpu.matmul %0, %1, %cst {dimension_numbers = #tpu.dot_dimension_numbers<[1], [0], [0], [1], [0, 0, 1, 1], [], []>} : vector<2x32xbf16>, vector<32x16xbf16>, vector<2x16xf32> -> vector<2x16xf32>
    %c0_3 = arith.constant 0 : index
    %c0_4 = arith.constant 0 : index
    %3 = vector.load %arg3[%c0_3, %c0_4] : memref<1x16xf32, #tpu.memory_space<vmem>>, vector<1x16xf32>
    %4 = vector.broadcast %3 : vector<1x16xf32> to vector<2x16xf32>
    %5 = arith.addf %2, %4 : vector<2x16xf32>
    %cst_5 = arith.constant 0.000000e+00 : f32
    %6 = vector.broadcast %cst_5 : f32 to vector<2x16xf32>
    %7 = arith.maximumf %5, %6 : vector<2x16xf32>
    %c0_6 = arith.constant 0 : index
    %c0_7 = arith.constant 0 : index
    %8 = vector.load %arg4[%c0_6, %c0_7] : memref<16x128xf32, #tpu.memory_space<vmem>>, vector<16x128xf32>
    %cst_8 = arith.constant dense<0.000000e+00> : vector<2x128xf32>
    %9 = tpu.matmul %7, %8, %cst_8 {dimension_numbers = #tpu.dot_dimension_numbers<[1], [0], [0], [1], [0, 0, 1, 1], [], []>} : vector<2x16xf32>, vector<16x128xf32>, vector<2x128xf32> -> vector<2x128xf32>
    %c0_9 = arith.constant 0 : index
    %c0_10 = arith.constant 0 : index
    %10 = vector.load %arg5[%c0_9, %c0_10] : memref<1x128xf32, #tpu.memory_space<vmem>>, vector<1x128xf32>
    %11 = vector.broadcast %10 : vector<1x128xf32> to vector<2x128xf32>
    %12 = arith.addf %9, %11 : vector<2x128xf32>
    %c0_11 = arith.constant 0 : index
    %c0_12 = arith.constant 0 : index
    %13 = vector.load %arg7[%c0_11, %c0_12] : memref<2x128xf32, #tpu.memory_space<vmem>>, vector<2x128xf32>
    tpu.vector_store %arg7[%c0_11, %c0_12], %12 {strides = array<i32>} : memref<2x128xf32, #tpu.memory_space<vmem>>, vector<2x128xf32>,
    %cst_13 = arith.constant dense<0xFF800000> : vector<2xf32>
    %14 = vector.multi_reduction <maximumf>, %12, %cst_13 [1] : vector<2x128xf32> to vector<2xf32>
    %15 = vector.shape_cast %14 : vector<2xf32> to vector<2x1xf32>
    %16 = vector.broadcast %15 : vector<2x1xf32> to vector<2x128xf32>
    %17 = arith.subf %12, %16 : vector<2x128xf32>
    %18 = math.exp %17 : vector<2x128xf32>
    %cst_14 = arith.constant dense<0.000000e+00> : vector<2xf32>
    %19 = vector.multi_reduction <add>, %18, %cst_14 [1] : vector<2x128xf32> to vector<2xf32>
    %20 = vector.shape_cast %19 : vector<2xf32> to vector<2x1xf32>
    %21 = math.log %20 : vector<2x1xf32>
    %22 = arith.addf %15, %21 : vector<2x1xf32>
    %23 = tpu.iota {dimensions = array<i32: 1>} : vector<2x128xi32>
    %c0_15 = arith.constant 0 : index
    %c0_16 = arith.constant 0 : index
    %24 = vector.load %arg6[%c0_15, %c0_16] : memref<2x1xi32, #tpu.memory_space<vmem>>, vector<2x1xi32>
    %25 = vector.broadcast %24 : vector<2x1xi32> to vector<2x128xi32>
    %26 = arith.cmpi eq, %23, %25 : vector<2x128xi32>
    %cst_17 = arith.constant 0.000000e+00 : f32
    %27 = vector.broadcast %cst_17 : f32 to vector<2x128xf32>
    %28 = arith.select %26, %12, %27 : vector<2x128xi1>, vector<2x128xf32>
    %cst_18 = arith.constant dense<0.000000e+00> : vector<2xf32>
    %29 = vector.multi_reduction <add>, %28, %cst_18 [1] : vector<2x128xf32> to vector<2xf32>
    %30 = vector.shape_cast %29 : vector<2xf32> to vector<2x1xf32>
    %31 = arith.subf %22, %30 : vector<2x1xf32>
    %c0_19 = arith.constant 0 : index
    %c0_20 = arith.constant 0 : index
    %32 = vector.load %arg8[%c0_19, %c0_20] : memref<2x1xf32, #tpu.memory_space<vmem>>, vector<2x1xf32>
    tpu.vector_store %arg8[%c0_19, %c0_20], %31 {strides = array<i32>} : memref<2x1xf32, #tpu.memory_space<vmem>>, vector<2x1xf32>,
    return
  }
  func.func @transform_0(%arg0: i32) -> (i32, i32) {
    %c0_i32 = arith.constant 0 : i32
    %c0_i32_0 = arith.constant 0 : i32
    return %arg0, %c0_i32 : i32, i32
  }
  func.func @transform_1(%arg0: i32) -> (i32, i32) {
    %c0_i32 = arith.constant 0 : i32
    %c0_i32_0 = arith.constant 0 : i32
    %c0_i32_1 = arith.constant 0 : i32
    return %c0_i32, %c0_i32_0 : i32, i32
  }
  func.func @transform_2(%arg0: i32) -> (i32, i32) {
    %c0_i32 = arith.constant 0 : i32
    %c0_i32_0 = arith.constant 0 : i32
    %c0_i32_1 = arith.constant 0 : i32
    return %c0_i32, %c0_i32_0 : i32, i32
  }
  func.func @transform_3(%arg0: i32) -> (i32, i32) {
    %c0_i32 = arith.constant 0 : i32
    %c0_i32_0 = arith.constant 0 : i32
    %c0_i32_1 = arith.constant 0 : i32
    return %c0_i32, %c0_i32_0 : i32, i32
  }
  func.func @transform_4(%arg0: i32) -> (i32, i32) {
    %c0_i32 = arith.constant 0 : i32
    %c0_i32_0 = arith.constant 0 : i32
    %c0_i32_1 = arith.constant 0 : i32
    return %c0_i32, %c0_i32_0 : i32, i32
  }
  func.func @transform_5(%arg0: i32) -> (i32, i32) {
    %c0_i32 = arith.constant 0 : i32
    %c0_i32_0 = arith.constant 0 : i32
    return %arg0, %c0_i32 : i32, i32
  }
  func.func @transform_6(%arg0: i32) -> (i32, i32) {
    %c0_i32 = arith.constant 0 : i32
    %c0_i32_0 = arith.constant 0 : i32
    return %arg0, %c0_i32 : i32, i32
  }
  func.func @transform_7(%arg0: i32) -> (i32, i32) {
    %c0_i32 = arith.constant 0 : i32
    %c0_i32_0 = arith.constant 0 : i32
    return %arg0, %c0_i32 : i32, i32
  }
}

</mosaic_0001>

<llo_original>
// kernel: tpu_custom_call.1
$region0: #{tpu_custom_call.1}
  #allocation0 [shape = 'u32[]', space=smem, size = 0x4, offset = 0x4, fixed_abs, tag = 'smem constant byte address 0x4 - core index']
  #allocation1 [shape = 'u32[144,128]{1,0:T(1,128)}', space=vmem, size = 0x12000, scoped, tag = 'internal scratch']
  %s0 = inlined_call_operand.vmem [shape: bf16[2,32], index: 0, kind: input, shape index: {}]
  %s1 = inlined_call_operand.vmem [shape: bf16[32,16], index: 1, kind: input, shape index: {}]
  %s2 = inlined_call_operand.vmem [shape: f32[1,16], index: 2, kind: input, shape index: {}]
  %s3 = inlined_call_operand.vmem [shape: f32[16,128], index: 3, kind: input, shape index: {}]
  %s4 = inlined_call_operand.vmem [shape: f32[1,128], index: 4, kind: input, shape index: {}]
  %s5 = inlined_call_operand.vmem [shape: s32[2,1], index: 5, kind: input, shape index: {}]
  %s6 = inlined_call_operand.hbm [shape: f32[2,128], index: 6, kind: output, shape index: {0}]
  %s7 = inlined_call_operand.vmem [shape: f32[2,1], index: 7, kind: output, shape index: {1}]
  %8 = xla_tuple %s6, %s7
  %s9 = sld [smem:[#allocation0]]
  $region42: #{tpu_custom_call.1} parent=0
    _
  %s11 = ssub.s32 1, %s9
  %s12 = scalar_select 0, %s11, %s9
  $region1: #{tpu_custom_call.1} parent=0
    #allocation2 [shape = 'u8[1024]{0}', space=vmem, size = 0x400, scoped, tag = 'output window, operand 0, single buffered']
    #allocation3 [shape = 's32[1]{0}', space=sflag, size = 0x4, scoped, tag = 'scoped memory for tpu_custom_call.1']
    %13 = vsyncpa [#allocation3], 0
    // Predicated region
    $region2: #{tpu_custom_call.1} parent=1 // pred_check
      _
    $region3: #{tpu_custom_call.1} parent=1 // pred_check_branch
      %15 = sbr.rel (0) target = $region5
    $region4: #{tpu_custom_call.1} parent=1 // pred_region
      _
    $region5: #{tpu_custom_call.1} parent=1 // pred_fallthru
      _
    // Predicated region
    $region6: #{tpu_custom_call.1} parent=1 // pred_check
      _
    $region7: #{tpu_custom_call.1} parent=1 // pred_check_branch
      %17 = sbr.rel (0) target = $region9
    $region8: #{tpu_custom_call.1} parent=1 // pred_region
      _
    $region9: #{tpu_custom_call.1} parent=1 // pred_fallthru
      _
    // Predicated region
    $region10: #{tpu_custom_call.1} parent=1 // pred_check
      _
    $region11: #{tpu_custom_call.1} parent=1 // pred_check_branch
      %19 = sbr.rel (0) target = $region13
    $region12: #{tpu_custom_call.1} parent=1 // pred_region
      _
    $region13: #{tpu_custom_call.1} parent=1 // pred_fallthru
      _
    // Predicated region
    $region14: #{tpu_custom_call.1} parent=1 // pred_check
      _
    $region15: #{tpu_custom_call.1} parent=1 // pred_check_branch
      %21 = sbr.rel (0) target = $region17
    $region16: #{tpu_custom_call.1} parent=1 // pred_region
      _
    $region17: #{tpu_custom_call.1} parent=1 // pred_fallthru
      _
    // Predicated region
    $region18: #{tpu_custom_call.1} parent=1 // pred_check
      _
    $region19: #{tpu_custom_call.1} parent=1 // pred_check_branch
      %23 = sbr.rel (0) target = $region21
    $region20: #{tpu_custom_call.1} parent=1 // pred_region
      _
    $region21: #{tpu_custom_call.1} parent=1 // pred_fallthru
      _
    // Predicated region
    $region22: #{tpu_custom_call.1} parent=1 // pred_check
      _
    $region23: #{tpu_custom_call.1} parent=1 // pred_check_branch
      %25 = sbr.rel (0) target = $region25
    $region24: #{tpu_custom_call.1} parent=1 // pred_region
      _
    $region25: #{tpu_custom_call.1} parent=1 // pred_fallthru
      _
    %v27 = vld [vmem:[%s0] sm:$0x1]
    %v28 = vld [vmem:[%s1] sm:$0xf]
    %v29 = vld [vmem:[%s1 + $0x4] sm:$0xf]
    %v30 = vld [vmem:[%s1 + $0x8] sm:$0xf]
    %v31 = vld [vmem:[%s1 + $0xc] sm:$0xf]
    %v32 = vld [vmem:[%s2] sm:$0x1]
    %v34 = vlaneseq
    %v35 = vshrl.u32 %v34, 7
    %v36 = vsub.s32 0, %v35
    %v37 = vrot.slane %v32, %v36
    %v43 = vunpack.c.l.b16 %v28
    %v44 = vunpack.c.l.b16 %v29
    %v45 = vunpack.c.l.b16 %v30
    %v46 = vunpack.c.l.b16 %v31
    %v47 = vpack.c.b16 %v44, %v43
    %v48 = vpack.c.b16 %v46, %v45
    %vm51 = vcmask 261120
    %v53 = vsel %vm51, %v27, 0
    %55 = vmatprep.subr.bf16.mxu0 0
    %56 = vmatpush1.bf16.msra.mxu0 0
    %57 = vmatprep.subr.bf16.mxu0 0
    %58 = vmatpush1.bf16.msra.mxu0 0
    %59 = vmatprep.subr.bf16.mxu0 0
    %60 = vmatpush1.bf16.msra.mxu0 0
    %61 = vmatprep.subr.bf16.mxu0 0
    %62 = vmatpush1.bf16.msra.mxu0 0
    %63 = vmatprep.subr.bf16.mxu0 0
    %64 = vmatpush1.bf16.msra.mxu0 0
    %65 = vmatprep.subr.bf16.mxu0 0
    %66 = vmatpush1.bf16.msra.mxu0 0
    %67 = vmatprep.subr.bf16.mxu0 0
    %68 = vmatpush1.bf16.msra.mxu0 %v48
    %69 = vmatprep.subr.bf16.mxu0 0
    %70 = vmatpush1.bf16.msra.mxu0 %v47
    %71 = vmatprep.subr.bf16.mxu0 0
    %72 = vmatpush2.bf16.msra.mxu0 0
    %73 = vmatprep.subr.bf16.mxu0 0
    %74 = vmatpush2.bf16.msra.mxu0 0
    %75 = vmatprep.subr.bf16.mxu0 0
    %76 = vmatpush2.bf16.msra.mxu0 0
    %77 = vmatprep.subr.bf16.mxu0 0
    %78 = vmatpush2.bf16.msra.mxu0 0
    %79 = vmatprep.subr.bf16.mxu0 0
    %80 = vmatpush2.bf16.msra.mxu0 0
    %81 = vmatprep.subr.bf16.mxu0 0
    %82 = vmatpush2.bf16.msra.mxu0 0
    %83 = vmatprep.subr.bf16.mxu0 0
    %84 = vmatpush2.bf16.msra.mxu0 0
    %85 = vmatprep.subr.bf16.mxu0 0
    %86 = vmatpush2.bf16.msra.mxu0 0
    %87 = vmatprep.mubr.bf16.mxu0 0
    %88 = vmatmul.mubr.bf16.gmra.mxu0 %v53
    %v89 = vpop.f32.mrf.mxu0
    %v90 = vadd.f32 %v37, %v89
    %v91 = vpop.f32.mrf.mxu0
    %v92 = vpop.f32.mrf.mxu0
    %v93 = vpop.f32.mrf.mxu0
    %94 = vdwg.mxu0
    %v95 = vmax.f32 %v90, 0.0
    %v96 = vld [vmem:[%s3] sm:$0xff]
    %v97 = vld [vmem:[%s3 + $0x8] sm:$0xff]
    %v98 = vld [vmem:[%s4] sm:$0x1]
    %v100 = vlaneseq
    %v101 = vshrl.u32 %v100, 7
    %v102 = vsub.s32 0, %v101
    %v103 = vrot.slane %v98, %v102
    %vm105 = vcmask 130048
    %v107 = vsel %vm105, %v95, 0
    %109 = vmatprep.subr.mxu0 0.0
    %110 = vmatpush1.msra.mxu0 0.0
    %111 = vmatprep.subr.mxu0 0.0
    %112 = vmatpush1.msra.mxu0 0.0
    %113 = vmatprep.subr.mxu0 0.0
    %114 = vmatpush1.msra.mxu0 0.0
    %115 = vmatprep.subr.mxu0 0.0
    %116 = vmatpush1.msra.mxu0 0.0
    %117 = vmatprep.subr.mxu0 0.0
    %118 = vmatpush1.msra.mxu0 0.0
    %119 = vmatprep.subr.mxu0 0.0
    %120 = vmatpush1.msra.mxu0 0.0
    %121 = vmatprep.subr.mxu0 0.0
    %122 = vmatpush1.msra.mxu0 0.0
    %123 = vmatprep.subr.mxu0 0.0
    %124 = vmatpush1.msra.mxu0 0.0
    %125 = vmatprep.subr.mxu0 0.0
    %126 = vmatpush1.msra.mxu0 0.0
    %127 = vmatprep.subr.mxu0 0.0
    %128 = vmatpush1.msra.mxu0 0.0
    %129 = vmatprep.subr.mxu0 0.0
    %130 = vmatpush1.msra.mxu0 0.0
    %131 = vmatprep.subr.mxu0 0.0
    %132 = vmatpush1.msra.mxu0 0.0
    %133 = vmatprep.subr.mxu0 0.0
    %134 = vmatpush1.msra.mxu0 0.0
    %135 = vmatprep.subr.mxu0 0.0
    %136 = vmatpush1.msra.mxu0 0.0
    %137 = vmatprep.subr.mxu0 0.0
    %138 = vmatpush1.msra.mxu0 %v97
    %139 = vmatprep.subr.mxu0 0.0
    %140 = vmatpush1.msra.mxu0 %v96
    %141 = vmatprep.subr.mxu0 0.0
    %142 = vmatpush2.msra.mxu0 0.0
    %143 = vmatprep.subr.mxu0 0.0
    %144 = vmatpush2.msra.mxu0 0.0
    %145 = vmatprep.subr.mxu0 0.0
    %146 = vmatpush2.msra.mxu0 0.0
    %147 = vmatprep.subr.mxu0 0.0
    %148 = vmatpush2.msra.mxu0 0.0
    %149 = vmatprep.subr.mxu0 0.0
    %150 = vmatpush2.msra.mxu0 0.0
    %151 = vmatprep.subr.mxu0 0.0
    %152 = vmatpush2.msra.mxu0 0.0
    %153 = vmatprep.subr.mxu0 0.0
    %154 = vmatpush2.msra.mxu0 0.0
    %155 = vmatprep.subr.mxu0 0.0
    %156 = vmatpush2.msra.mxu0 0.0
    %157 = vmatprep.subr.mxu0 0.0
    %158 = vmatpush2.msra.mxu0 0.0
    %159 = vmatprep.subr.mxu0 0.0
    %160 = vmatpush2.msra.mxu0 0.0
    %161 = vmatprep.subr.mxu0 0.0
    %162 = vmatpush2.msra.mxu0 0.0
    %163 = vmatprep.subr.mxu0 0.0
    %164 = vmatpush2.msra.mxu0 0.0
    %165 = vmatprep.subr.mxu0 0.0
    %166 = vmatpush2.msra.mxu0 0.0
    %167 = vmatprep.subr.mxu0 0.0
    %168 = vmatpush2.msra.mxu0 0.0
    %169 = vmatprep.subr.mxu0 0.0
    %170 = vmatpush2.msra.mxu0 0.0
    %171 = vmatprep.subr.mxu0 0.0
    %172 = vmatpush2.msra.mxu0 0.0
    %173 = vmatprep.mubr.f32.mxu0 0.0
    %174 = vmatmul.mubr.f32.gmra.mxu0 %v107
    %v175 = vpop.f32.mrf.mxu0
    %v176 = vadd.f32 %v103, %v175
    %v177 = vpop.f32.mrf.mxu0
    %178 = vdwg.mxu0
    %179 = vst [vmem:[#allocation2] sm:$0x3] %v176
    %vm180 = vcmask 1041408
    %v181 = vsel %vm180, %v176, -inf
    %182 = vmax.xlane.f32.xlu0 %v181
    %v183 = vpop.xlane.xlu0 %182
    %v184 = vsub.f32 %v176, %v183
    %v185 = vmul.f32 %v184, 1.442695
    %v186 = vpow.pop %v185
    %v187 = vsel %vm180, %v186, 0.0
    %188 = vadd.xlane.f32.xlu0 %v187
    %v189 = vpop.xlane.xlu0 %188
    %v190 = vlog2.pop %v189
    %v191 = vmul.f32 %v190, 0.6931472
    %v192 = vadd.f32 %v183, %v191
    %v193 = vlaneseq
    %v194 = vand.u32 %v193, 127
    %v195 = vld [vmem:[%s5] sm:$0x3]
    %196 = vset.pattern.permute.xlu0 0
    %197 = vperm.xlu0 %196, %v195
    %v198 = vpop.permute.xlu0 %197
    %vm199 = vcmp.eq.s32.totalorder %v194, %v198
    %v200 = vsel %vm199, %v176, 0.0
    %v201 = vsel %vm180, %v200, 0.0
    %202 = vadd.xlane.f32.xlu0 %v201
    %v203 = vpop.xlane.xlu0 %202
    %v204 = vsub.f32 %v192, %v203
    %vm205 = vcmask 1024
    %206 = vst.msk [vmem:[%s7] sm:$0x3] %vm205, %v204
    // Predicated region
    $region26: #{tpu_custom_call.1} parent=1 // pred_check
      _
    $region27: #{tpu_custom_call.1} parent=1 // pred_check_branch
      %208 = sbr.rel (0) target = $region29
    $region28: #{tpu_custom_call.1} parent=1 // pred_region
      %s210 = ssub.s32 32, 32
      %211 = vsyncadd [#allocation3], %s210
      %s213 = sshll.u32 [#allocation2], 4
      %s214 = int_to_ptr.vmem [resolvable:$true] %s213
      %216 = dma.vmem_to_hbm [thread:$0]  %s214, 32, %s6, [#allocation3]
    $region29: #{tpu_custom_call.1} parent=1 // pred_fallthru
      _
    // Predicated region
    $region30: #{tpu_custom_call.1} parent=1 // pred_check
      _
    $region31: #{tpu_custom_call.1} parent=1 // pred_check_branch
      %218 = sbr.rel (0) target = $region33
    $region32: #{tpu_custom_call.1} parent=1 // pred_region
      _
    $region33: #{tpu_custom_call.1} parent=1 // pred_fallthru
      _
    // Predicated region
    $region34: #{tpu_custom_call.1} parent=1 // pred_check
      _
    $region35: #{tpu_custom_call.1} parent=1 // pred_check_branch
      %220 = sbr.rel (0) target = $region37
    $region36: #{tpu_custom_call.1} parent=1 // pred_region
      %221 = dma.done [#allocation3], 32
    $region37: #{tpu_custom_call.1} parent=1 // pred_fallthru
      _
    // Predicated region
    $region38: #{tpu_custom_call.1} parent=1 // pred_check
      _
    $region39: #{tpu_custom_call.1} parent=1 // pred_check_branch
      %223 = sbr.rel (0) target = $region41
    $region40: #{tpu_custom_call.1} parent=1 // pred_region
      _
    $region41: #{tpu_custom_call.1} parent=1 // pred_fallthru
      _
    %224 = vsyncpa [#allocation3], 1

</llo_original>
